<compile_context>
chip_gen: v5e
topology: v5e:2x2
jax: 0.10.0
libtpu: 0.0.40
codegen_flags: <defaults>
</compile_context>

<pallas_src>
import math

import jax
import jax.numpy as jnp
from jax import lax
from jax.experimental import pallas as pl
from jax.experimental.pallas import tpu as pltpu

_BN_EPS = 1e-5


def _batchnorm1d(v, axis):
    # nn.BatchNorm1d(affine=False, track_running_stats=False): per-column batch
    # stats over the node axis of each graph, *biased* variance.  One-pass form
    # (single XLU reduction sweep for mean and E[v^2]); normalize in f32 on the
    # VPU.  NOTE: one-pass variance can lose precision if |mean| >> std; fine
    # at these magnitudes.
    mean = jnp.mean(v, axis=axis, keepdims=True)
    meansq = jnp.mean(v * v, axis=axis, keepdims=True)
    var = jnp.maximum(meansq - mean * mean, 0.0)
    return (v - mean) * lax.rsqrt(var + _BN_EPS)


def _gcn_resblock_kernel(adj_ref, x_ref, wx_ref, w1_ref, out_ref):
    bblk, n, _ = adj_ref.shape
    f_in = x_ref.shape[-1]
    f_pad = w1_ref.shape[0]

    adj = adj_ref[...]                        # (Bblk, N, N)     bf16
    x = x_ref[...].reshape(bblk * n, f_in)    # (Bblk*N, F_in)   bf16
    wx = wx_ref[...]                          # (F_in, 2*F_pad)  bf16 = [Wg | W2]
    w1 = w1_ref[...]                          # (F_pad, F_pad)   bf16

    # Fused x-path matmul across all Bblk graphs in one MXU pass:
    # [x @ Wg | x @ W2] with bf16 operands / f32 accumulation.
    xw = jnp.dot(x, wx, preferred_element_type=jnp.float32)    # (Bblk*N, 2*F_pad)
    support = xw[:, :f_pad].reshape(bblk, n, f_pad)
    z2 = xw[:, f_pad:].reshape(bblk, n, f_pad)

    # Per-graph GCN aggregation (batched MXU pass) + per-graph BN + ReLU.
    # Padded feature columns are exactly zero throughout.
    o = jnp.einsum('bij,bjf->bif', adj, support.astype(jnp.bfloat16),
                   preferred_element_type=jnp.float32)          # (Bblk, N, F_pad)
    y1 = jnp.maximum(_batchnorm1d(o, axis=1), 0.0)

    # LinearLayer1 matmul, flattened across the Bblk graphs (bias b1 cancels
    # inside the following affine-free BatchNorm).
    z1 = jnp.dot(y1.reshape(bblk * n, f_pad).astype(jnp.bfloat16), w1,
                 preferred_element_type=jnp.float32).reshape(bblk, n, f_pad)

    # Separate trailing BatchNorms (no lane-concat: same XLU reduction work,
    # no extra (N, 2*F_pad) VMEM copy).
    out_ref[...] = jnp.maximum(
        _batchnorm1d(z1, axis=1) + _batchnorm1d(z2, axis=1), 0.0)


def _pick_graphs_per_step(batch, n, target_rows=128):
    """Graphs per grid step: largest divisor of `batch` with bblk*n <= ~128
    rows (MXU-shaped matmuls), capped so the grid keeps >= 2 steps when
    batch >= 2 (lets ("parallel",) shard across v7x's two TensorCores)."""
    cap = max(1, target_rows // max(n, 1))
    if batch >= 2:
        cap = min(cap, batch // 2)
    cap = max(cap, 1)
    best = 1
    for d in range(1, min(cap, batch) + 1):
        if batch % d == 0:
            best = d
    return best


def gcn_resblock(adj, x, wg, w1, b1, w2, b2):
    """Batched GCN_RESBLOCK forward.

    adj: (B, N, N), x: (B, N, F_in); parameters are shared across the batch.
    BatchNorm statistics are computed per graph (over its N nodes), matching
    a per-graph application of the PyTorch module.  b1/b2 are accepted for
    parity but are mathematical no-ops: each Linear is immediately followed
    by BatchNorm1d(affine=False), which subtracts the per-column mean, so a
    per-column constant bias cancels exactly.
    """
    del b1, b2  # cancelled by the affine-free BatchNorm following each Linear
    batch, n, f_in = x.shape
    f_out = wg.shape[1]
    f_pad = ((f_out + 127) // 128) * 128       # lane-dense feature width

    bblk = _pick_graphs_per_step(batch, n)
    grid = batch // bblk

    # Wrapper-side, once-per-call packing + bf16 cast of everything that feeds
    # the MXU (halves resident-weight and adj/x DMA bytes, removes per-step
    # VPU casts; rounding identical to casting in-kernel).
    wg_p = jnp.pad(wg, ((0, 0), (0, f_pad - f_out)))
    w2_p = jnp.pad(w2, ((0, 0), (0, f_pad - f_out)))
    wx = jnp.concatenate([wg_p, w2_p], axis=1).astype(jnp.bfloat16)  # (F_in, 2*F_pad)
    w1_p = jnp.pad(w1, ((0, f_pad - f_out), (0, f_pad - f_out))).astype(jnp.bfloat16)
    # TODO(synk): produce adj/x in bf16 upstream (inside TLP's encoder) so
    # these standalone cast ops disappear entirely.
    adj_b = adj.astype(jnp.bfloat16)
    x_b = x.astype(jnp.bfloat16)

    out_padded = pl.pallas_call(
        _gcn_resblock_kernel,
        out_shape=jax.ShapeDtypeStruct((batch, n, f_pad), jnp.float32),
        grid=(grid,),
        in_specs=[
            pl.BlockSpec((bblk, n, n), lambda g: (g, 0, 0)),       # adj block
            pl.BlockSpec((bblk, n, f_in), lambda g: (g, 0, 0)),    # x block
            pl.BlockSpec((f_in, 2 * f_pad), lambda g: (0, 0)),     # wx (resident)
            pl.BlockSpec((f_pad, f_pad), lambda g: (0, 0)),        # w1 (resident)
        ],
        out_specs=pl.BlockSpec((bblk, n, f_pad), lambda g: (g, 0, 0)),
        compiler_params=pltpu.CompilerParams(
            # Independent groups of graphs: pipeline over the grid; shardable
            # across the two TensorCores of a v7x chip (grid >= 2 by design).
            dimension_semantics=("parallel",),
        ),
    )(adj_b, x_b, wx, w1_p)

    # TODO(synk): downstream TLP layers could consume the F_pad-padded (or
    # bf16) slab directly and skip this extra HBM round trip.
    return out_padded[:, :, :f_out]


def _reference(adj, x, wg, w1, b1, w2, b2, matmul_dtype=jnp.float32):
    """Straight-line JAX port of GCN_RESBLOCK.forward (single graph)."""
    def mm(a, b):
        return jnp.dot(a.astype(matmul_dtype), b.astype(matmul_dtype),
                       preferred_element_type=jnp.float32)

    def bn(v):  # two-pass form, exactly as nn.BatchNorm1d(affine=False)
        mean = jnp.mean(v, axis=0, keepdims=True)
        var = jnp.mean((v - mean) ** 2, axis=0, keepdims=True)
        return (v - mean) * lax.rsqrt(var + _BN_EPS)

    o = mm(adj, mm(x, wg))
    y1 = jnp.maximum(bn(o), 0.0)
    y1 = bn(mm(y1, w1) + b1)
    y2 = bn(mm(x, w2) + b2)
    return jnp.maximum(y1 + y2, 0.0)


if __name__ == "__main__":
    B = 8        # independent graphs, Bblk of them per grid step
    N = 16       # nodes per graph (BatchNorm1d batch dimension)
    F_IN = 32    # input_size
    F_OUT = 32   # output_size

    key = jax.random.PRNGKey(0)
    k_adj, k_x, k_wg, k_w1, k_b1, k_w2, k_b2 = jax.random.split(key, 7)

    adj = jax.random.uniform(k_adj, (B, N, N), jnp.float32)
    x = jax.random.normal(k_x, (B, N, F_IN), jnp.float32)

    # Deterministic parameter init (shapes/ranges match the PyTorch module).
    std_g = 1.0 / math.sqrt(F_OUT)
    wg = jax.random.uniform(k_wg, (F_IN, F_OUT), jnp.float32, -std_g, std_g)

    std_1 = 1.0 / math.sqrt(F_OUT)
    w1 = jax.random.uniform(k_w1, (F_OUT, F_OUT), jnp.float32, -std_1, std_1)
    b1 = jax.random.uniform(k_b1, (1, F_OUT), jnp.float32, -std_1, std_1)

    std_2 = 1.0 / math.sqrt(F_IN)
    w2 = jax.random.uniform(k_w2, (F_IN, F_OUT), jnp.float32, -std_2, std_2)
    b2 = jax.random.uniform(k_b2, (1, F_OUT), jnp.float32, -std_2, std_2)

    out = gcn_resblock(adj, x, wg, w1, b1, w2, b2)
    jax.block_until_ready(out)
    assert out.shape == (B, N, F_OUT)

    # Check 1: reference in the same arithmetic regime (bf16 MXU operands with
    # f32 accumulation, biases included) -> tight tolerance.
    ref_bf16 = jax.vmap(
        lambda a, xx: _reference(a, xx, wg, w1, b1, w2, b2,
                                 matmul_dtype=jnp.bfloat16))(adj, x)
    assert jnp.allclose(out, ref_bf16, atol=2e-3, rtol=2e-3), \
        "mismatch vs bf16-matmul reference"

    # Check 2: full float32 module semantics -> loose bound that only reflects
    # bf16 MXU operand rounding.
    ref_f32 = jax.vmap(
        lambda a, xx: _reference(a, xx, wg, w1, b1, w2, b2,
                                 matmul_dtype=jnp.float32))(adj, x)
    max_err = float(jnp.max(jnp.abs(out - ref_f32)))
    assert max_err < 1e-1, f"too far from float32 reference (max abs err {max_err})"

    print("KERNEL_OK")
</pallas_src>

<mosaic_0001>
module attributes {stable_mosaic.version = 11 : i64} {
  func.func @_gcn_resblock_kernel(%arg0: i32, %arg1: memref<4x16x16xbf16, #tpu.memory_space<vmem>>, %arg2: memref<4x16x32xbf16, #tpu.memory_space<vmem>>, %arg3: memref<32x256xbf16, #tpu.memory_space<vmem>>, %arg4: memref<128x128xbf16, #tpu.memory_space<vmem>>, %arg5: memref<4x16x128xf32, #tpu.memory_space<vmem>>) attributes {dimension_semantics = [#tpu.dimension_semantics<parallel>], iteration_bounds = array<i64: 2>, scalar_prefetch = 0 : i64, scratch_operands = 0 : i64, tpu.core_type = #tpu.core_type<tc>, window_params = [{transform_indices = @transform_0, window_bounds = array<i64: 4, 16, 16>}, {transform_indices = @transform_1, window_bounds = array<i64: 4, 16, 32>}, {pipeline_mode = #tpu.pipeline_mode<synchronous>, transform_indices = @transform_2, window_bounds = array<i64: 32, 256>}, {pipeline_mode = #tpu.pipeline_mode<synchronous>, transform_indices = @transform_3, window_bounds = array<i64: 128, 128>}, {transform_indices = @transform_4, window_bounds = array<i64: 4, 16, 128>}]} {
    %c0 = arith.constant 0 : index
    %c0_0 = arith.constant 0 : index
    %c0_1 = arith.constant 0 : index
    %0 = vector.load %arg1[%c0, %c0_0, %c0_1] : memref<4x16x16xbf16, #tpu.memory_space<vmem>>, vector<4x16x16xbf16>
    %c0_2 = arith.constant 0 : index
    %c0_3 = arith.constant 0 : index
    %c0_4 = arith.constant 0 : index
    %1 = vector.load %arg2[%c0_2, %c0_3, %c0_4] : memref<4x16x32xbf16, #tpu.memory_space<vmem>>, vector<4x16x32xbf16>
    %2 = vector.shape_cast %1 : vector<4x16x32xbf16> to vector<64x32xbf16>
    %c0_5 = arith.constant 0 : index
    %c0_6 = arith.constant 0 : index
    %3 = vector.load %arg3[%c0_5, %c0_6] : memref<32x256xbf16, #tpu.memory_space<vmem>>, vector<32x256xbf16>
    %c0_7 = arith.constant 0 : index
    %c0_8 = arith.constant 0 : index
    %4 = vector.load %arg4[%c0_7, %c0_8] : memref<128x128xbf16, #tpu.memory_space<vmem>>, vector<128x128xbf16>
    %cst = arith.constant dense<0.000000e+00> : vector<64x256xf32>
    %5 = tpu.matmul %2, %3, %cst {dimension_numbers = #tpu.dot_dimension_numbers<[1], [0], [0], [1], [0, 0, 1, 1], [], []>} : vector<64x32xbf16>, vector<32x256xbf16>, vector<64x256xf32> -> vector<64x256xf32>
    %6 = vector.extract_strided_slice %5 {offsets = [0, 0], sizes = [64, 128], strides = [1, 1]} : vector<64x256xf32> to vector<64x128xf32>
    %7 = vector.shape_cast %6 : vector<64x128xf32> to vector<4x16x128xf32>
    %8 = vector.extract_strided_slice %5 {offsets = [0, 128], sizes = [64, 128], strides = [1, 1]} : vector<64x256xf32> to vector<64x128xf32>
    %9 = vector.shape_cast %8 : vector<64x128xf32> to vector<4x16x128xf32>
    %10 = arith.truncf %7 : vector<4x16x128xf32> to vector<4x16x128xbf16>
    "tpu.trace_start"() <{level = 10 : i32, message = "bij,bjf->bif"}> : () -> ()
    %cst_9 = arith.constant dense<0.000000e+00> : vector<4x16x128xf32>
    %11 = tpu.matmul %0, %10, %cst_9 {dimension_numbers = #tpu.dot_dimension_numbers<[2], [1], [1], [2], [0, 0, 0, 1, 1, 2], [0], [0]>} : vector<4x16x16xbf16>, vector<4x16x128xbf16>, vector<4x16x128xf32> -> vector<4x16x128xf32>
    "tpu.trace_stop"() : () -> ()
    %cst_10 = arith.constant dense<0.000000e+00> : vector<4x128xf32>
    %12 = vector.multi_reduction <add>, %11, %cst_10 [1] : vector<4x16x128xf32> to vector<4x128xf32>
    %13 = vector.shape_cast %12 : vector<4x128xf32> to vector<4x1x128xf32>
    %cst_11 = arith.constant 1.600000e+01 : f32
    %14 = vector.broadcast %cst_11 : f32 to vector<4x1x128xf32>
    %15 = arith.divf %13, %14 : vector<4x1x128xf32>
    %16 = arith.mulf %11, %11 : vector<4x16x128xf32>
    %cst_12 = arith.constant dense<0.000000e+00> : vector<4x128xf32>
    %17 = vector.multi_reduction <add>, %16, %cst_12 [1] : vector<4x16x128xf32> to vector<4x128xf32>
    %18 = vector.shape_cast %17 : vector<4x128xf32> to vector<4x1x128xf32>
    %cst_13 = arith.constant 1.600000e+01 : f32
    %19 = vector.broadcast %cst_13 : f32 to vector<4x1x128xf32>
    %20 = arith.divf %18, %19 : vector<4x1x128xf32>
    %21 = arith.mulf %15, %15 : vector<4x1x128xf32>
    %22 = arith.subf %20, %21 : vector<4x1x128xf32>
    %cst_14 = arith.constant 0.000000e+00 : f32
    %23 = vector.broadcast %cst_14 : f32 to vector<4x1x128xf32>
    %24 = arith.maximumf %22, %23 : vector<4x1x128xf32>
    %25 = vector.broadcast %15 : vector<4x1x128xf32> to vector<4x16x128xf32>
    %26 = arith.subf %11, %25 : vector<4x16x128xf32>
    %cst_15 = arith.constant 9.99999974E-6 : f32
    %27 = vector.broadcast %cst_15 : f32 to vector<4x1x128xf32>
    %28 = arith.addf %24, %27 : vector<4x1x128xf32>
    %29 = math.rsqrt %28 : vector<4x1x128xf32>
    %30 = vector.broadcast %29 : vector<4x1x128xf32> to vector<4x16x128xf32>
    %31 = arith.mulf %26, %30 : vector<4x16x128xf32>
    %cst_16 = arith.constant 0.000000e+00 : f32
    %32 = vector.broadcast %cst_16 : f32 to vector<4x16x128xf32>
    %33 = arith.maximumf %31, %32 : vector<4x16x128xf32>
    %34 = vector.shape_cast %33 : vector<4x16x128xf32> to vector<64x128xf32>
    %35 = arith.truncf %34 : vector<64x128xf32> to vector<64x128xbf16>
    %cst_17 = arith.constant dense<0.000000e+00> : vector<64x128xf32>
    %36 = tpu.matmul %35, %4, %cst_17 {dimension_numbers = #tpu.dot_dimension_numbers<[1], [0], [0], [1], [0, 0, 1, 1], [], []>} : vector<64x128xbf16>, vector<128x128xbf16>, vector<64x128xf32> -> vector<64x128xf32>
    %37 = vector.shape_cast %36 : vector<64x128xf32> to vector<4x16x128xf32>
    %cst_18 = arith.constant dense<0.000000e+00> : vector<4x128xf32>
    %38 = vector.multi_reduction <add>, %37, %cst_18 [1] : vector<4x16x128xf32> to vector<4x128xf32>
    %39 = vector.shape_cast %38 : vector<4x128xf32> to vector<4x1x128xf32>
    %cst_19 = arith.constant 1.600000e+01 : f32
    %40 = vector.broadcast %cst_19 : f32 to vector<4x1x128xf32>
    %41 = arith.divf %39, %40 : vector<4x1x128xf32>
    %42 = arith.mulf %37, %37 : vector<4x16x128xf32>
    %cst_20 = arith.constant dense<0.000000e+00> : vector<4x128xf32>
    %43 = vector.multi_reduction <add>, %42, %cst_20 [1] : vector<4x16x128xf32> to vector<4x128xf32>
    %44 = vector.shape_cast %43 : vector<4x128xf32> to vector<4x1x128xf32>
    %cst_21 = arith.constant 1.600000e+01 : f32
    %45 = vector.broadcast %cst_21 : f32 to vector<4x1x128xf32>
    %46 = arith.divf %44, %45 : vector<4x1x128xf32>
    %47 = arith.mulf %41, %41 : vector<4x1x128xf32>
    %48 = arith.subf %46, %47 : vector<4x1x128xf32>
    %cst_22 = arith.constant 0.000000e+00 : f32
    %49 = vector.broadcast %cst_22 : f32 to vector<4x1x128xf32>
    %50 = arith.maximumf %48, %49 : vector<4x1x128xf32>
    %51 = vector.broadcast %41 : vector<4x1x128xf32> to vector<4x16x128xf32>
    %52 = arith.subf %37, %51 : vector<4x16x128xf32>
    %cst_23 = arith.constant 9.99999974E-6 : f32
    %53 = vector.broadcast %cst_23 : f32 to vector<4x1x128xf32>
    %54 = arith.addf %50, %53 : vector<4x1x128xf32>
    %55 = math.rsqrt %54 : vector<4x1x128xf32>
    %56 = vector.broadcast %55 : vector<4x1x128xf32> to vector<4x16x128xf32>
    %57 = arith.mulf %52, %56 : vector<4x16x128xf32>
    %cst_24 = arith.constant dense<0.000000e+00> : vector<4x128xf32>
    %58 = vector.multi_reduction <add>, %9, %cst_24 [1] : vector<4x16x128xf32> to vector<4x128xf32>
    %59 = vector.shape_cast %58 : vector<4x128xf32> to vector<4x1x128xf32>
    %cst_25 = arith.constant 1.600000e+01 : f32
    %60 = vector.broadcast %cst_25 : f32 to vector<4x1x128xf32>
    %61 = arith.divf %59, %60 : vector<4x1x128xf32>
    %62 = arith.mulf %9, %9 : vector<4x16x128xf32>
    %cst_26 = arith.constant dense<0.000000e+00> : vector<4x128xf32>
    %63 = vector.multi_reduction <add>, %62, %cst_26 [1] : vector<4x16x128xf32> to vector<4x128xf32>
    %64 = vector.shape_cast %63 : vector<4x128xf32> to vector<4x1x128xf32>
    %cst_27 = arith.constant 1.600000e+01 : f32
    %65 = vector.broadcast %cst_27 : f32 to vector<4x1x128xf32>
    %66 = arith.divf %64, %65 : vector<4x1x128xf32>
    %67 = arith.mulf %61, %61 : vector<4x1x128xf32>
    %68 = arith.subf %66, %67 : vector<4x1x128xf32>
    %cst_28 = arith.constant 0.000000e+00 : f32
    %69 = vector.broadcast %cst_28 : f32 to vector<4x1x128xf32>
    %70 = arith.maximumf %68, %69 : vector<4x1x128xf32>
    %71 = vector.broadcast %61 : vector<4x1x128xf32> to vector<4x16x128xf32>
    %72 = arith.subf %9, %71 : vector<4x16x128xf32>
    %cst_29 = arith.constant 9.99999974E-6 : f32
    %73 = vector.broadcast %cst_29 : f32 to vector<4x1x128xf32>
    %74 = arith.addf %70, %73 : vector<4x1x128xf32>
    %75 = math.rsqrt %74 : vector<4x1x128xf32>
    %76 = vector.broadcast %75 : vector<4x1x128xf32> to vector<4x16x128xf32>
    %77 = arith.mulf %72, %76 : vector<4x16x128xf32>
    %78 = arith.addf %57, %77 : vector<4x16x128xf32>
    %cst_30 = arith.constant 0.000000e+00 : f32
    %79 = vector.broadcast %cst_30 : f32 to vector<4x16x128xf32>
    %80 = arith.maximumf %78, %79 : vector<4x16x128xf32>
    %c0_31 = arith.constant 0 : index
    %c0_32 = arith.constant 0 : index
    %c0_33 = arith.constant 0 : index
    %81 = vector.load %arg5[%c0_31, %c0_32, %c0_33] : memref<4x16x128xf32, #tpu.memory_space<vmem>>, vector<4x16x128xf32>
    tpu.vector_store %arg5[%c0_31, %c0_32, %c0_33], %80 {strides = array<i32>} : memref<4x16x128xf32, #tpu.memory_space<vmem>>, vector<4x16x128xf32>,
    return
  }
  func.func @transform_0(%arg0: i32) -> (i32, i32, i32) {
    %c0_i32 = arith.constant 0 : i32
    %c0_i32_0 = arith.constant 0 : i32
    %c0_i32_1 = arith.constant 0 : i32
    return %arg0, %c0_i32, %c0_i32_0 : i32, i32, i32
  }
  func.func @transform_1(%arg0: i32) -> (i32, i32, i32) {
    %c0_i32 = arith.constant 0 : i32
    %c0_i32_0 = arith.constant 0 : i32
    %c0_i32_1 = arith.constant 0 : i32
    return %arg0, %c0_i32, %c0_i32_0 : i32, i32, i32
  }
  func.func @transform_2(%arg0: i32) -> (i32, i32) {
    %c0_i32 = arith.constant 0 : i32
    %c0_i32_0 = arith.constant 0 : i32
    %c0_i32_1 = arith.constant 0 : i32
    return %c0_i32, %c0_i32_0 : i32, i32
  }
  func.func @transform_3(%arg0: i32) -> (i32, i32) {
    %c0_i32 = arith.constant 0 : i32
    %c0_i32_0 = arith.constant 0 : i32
    %c0_i32_1 = arith.constant 0 : i32
    return %c0_i32, %c0_i32_0 : i32, i32
  }
  func.func @transform_4(%arg0: i32) -> (i32, i32, i32) {
    %c0_i32 = arith.constant 0 : i32
    %c0_i32_0 = arith.constant 0 : i32
    %c0_i32_1 = arith.constant 0 : i32
    return %arg0, %c0_i32, %c0_i32_0 : i32, i32, i32
  }
}

</mosaic_0001>

<llo_original>
// kernel: tpu_custom_call.1
$region0: #{tpu_custom_call.1}
  #allocation0 [shape = 'u32[]', space=smem, size = 0x4, offset = 0x4, fixed_abs, tag = 'smem constant byte address 0x4 - core index']
  #allocation1 [shape = 'u32[72,128]{1,0:T(1,128)}', space=vmem, size = 0x9000, scoped, tag = 'internal scratch']
  %s0 = inlined_call_operand.hbm [shape: bf16[8,16,16], index: 0, kind: input, shape index: {}]
  %s1 = inlined_call_operand.hbm [shape: bf16[8,16,32], index: 1, kind: input, shape index: {}]
  %s2 = inlined_call_operand.hbm [shape: bf16[32,256], index: 2, kind: input, shape index: {}]
  %s3 = inlined_call_operand.hbm [shape: bf16[128,128], index: 3, kind: input, shape index: {}]
  %s4 = inlined_call_operand.hbm [shape: f32[8,16,128], index: 4, kind: output, shape index: {}]
  %s5 = sld [smem:[#allocation0]]
  $region65: #{tpu_custom_call.1} parent=0
    _
  %s7 = ssub.s32 1, %s5
  %s8 = scalar_select 0, %s7, %s5
  $region1: #{tpu_custom_call.1} parent=0
    #allocation2 [shape = 'u8[32768]{0}', space=vmem, size = 0x8000, scoped, tag = 'input window, operand 0']
    #allocation3 [shape = 's32[2]{0}', space=sflag, size = 0x8, scoped, tag = 'scoped memory for tpu_custom_call.1']
    #allocation4 [shape = 's32[2]{0}', space=sflag, size = 0x8, scoped, tag = 'scoped memory for tpu_custom_call.1']
    #allocation5 [shape = 'u8[32768]{0}', space=vmem, size = 0x8000, scoped, tag = 'input window, operand 1']
    #allocation6 [shape = 's32[2]{0}', space=sflag, size = 0x8, scoped, tag = 'scoped memory for tpu_custom_call.1']
    #allocation7 [shape = 'u8[16384]{0}', space=vmem, size = 0x4000, scoped, tag = 'input window, operand 2, single buffered']
    #allocation8 [shape = 'u8[32768]{0}', space=vmem, size = 0x8000, scoped, tag = 'input window, operand 3, single buffered']
    #allocation9 [shape = 's32[1]{0}', space=sflag, size = 0x4, scoped, tag = 'scoped memory for tpu_custom_call.1']
    #allocation10 [shape = 'u8[65536]{0}', space=vmem, size = 0x10000, scoped, tag = 'output window, operand 0']
    %9 = vsyncpa [#allocation3], 0
    %s10 = scalar_lea.sflag [#allocation3], 1
    %11 = vsyncpa %s10, 0
    %12 = vsyncpa [#allocation6], 0
    %s13 = scalar_lea.sflag [#allocation6], 1
    %14 = vsyncpa %s13, 0
    %15 = vsyncpa [#allocation9], 0
    %16 = vsyncpa [#allocation4], 0
    %s17 = scalar_lea.sflag [#allocation4], 1
    %18 = vsyncpa %s17, 0
    loop: start=0, step=1, limit=4
    $region2: #{tpu_custom_call.1} parent=1 // loop_pre_header
      _
    $region3: #{tpu_custom_call.1} parent=1 // loop_header
      %s20 = sphi 0, %s24
      %p21 = scmp.ge.s32.totalorder %s20, 4
      %s30 = sphi 0, %s32
      %s33 = sphi 0, %s30
      %s34 = sphi 0, %s33
      %s50 = sphi 0, %s34
      %s56 = sphi 0, %s58
      %s59 = sphi 0, %s56
      %s60 = sphi 0, %s59
      %s76 = sphi 0, %s60
      %s80 = sphi 0, %s80
      %s82 = sphi 0, %s80
      %s83 = sphi 0, %s82
      %s97 = sphi 0, %s83
      %s101 = sphi 0, %s101
      %s103 = sphi 0, %s101
      %s104 = sphi 0, %s103
      %s118 = sphi 0, %s104
      %s124 = sphi 0, %s126
      %s127 = sphi 0, %s124
      %s128 = sphi 0, %s127
      %s144 = sphi 0, %s128
    $region4: #{tpu_custom_call.1} parent=1 // loop_header_branch
      %23 = sbr.rel (%p21) target = $region8
    $region5: #{tpu_custom_call.1} parent=1 // loop_body
      %s25 = ssub.s32 %s20, 1
      %s26 = ssub.s32 %s20, 2
      %s27 = sadd.s32 %s20, 1
      %s28 = ssub.s32 %s20, %s27
      %p29 = scmp.eq.s32.totalorder %s28, 0
      %s31 = sadd.s32 %s30, 1
      %s32 = scalar_select %p29, %s30, %s31
      %p35 = pneg %p29
      %p36 = scmp.eq.s32.totalorder %s20, 1
      %p37 = por %p35, %p36
      %p38 = scmp.ne.s32.totalorder %s30, %s33
      %p39 = scmp.eq.s32.totalorder %s20, 0
      %p40 = por %p38, %p39
      %p41 = scmp.ne.s32.totalorder %s30, %s33
      %p42 = scmp.eq.s32.totalorder %s25, 1
      %p43 = por %p41, %p42
      %p44 = scmp.ne.s32.totalorder %s33, %s34
      %p45 = scmp.eq.s32.totalorder %s25, 0
      %p46 = por %p44, %p45
      %p47 = scmp.ne.s32.totalorder %s33, %s34
      %p48 = scmp.eq.s32.totalorder %s26, 1
      %p49 = por %p47, %p48
      %p51 = scmp.ne.s32.totalorder %s34, %s50
      %p52 = scmp.eq.s32.totalorder %s26, 0
      %p53 = por %p51, %p52
      %s54 = ssub.s32 %s20, %s27
      %p55 = scmp.eq.s32.totalorder %s54, 0
      %s57 = sadd.s32 %s56, 1
      %s58 = scalar_select %p55, %s56, %s57
      %p61 = pneg %p55
      %p62 = scmp.eq.s32.totalorder %s20, 1
      %p63 = por %p61, %p62
      %p64 = scmp.ne.s32.totalorder %s56, %s59
      %p65 = scmp.eq.s32.totalorder %s20, 0
      %p66 = por %p64, %p65
      %p67 = scmp.ne.s32.totalorder %s56, %s59
      %p68 = scmp.eq.s32.totalorder %s25, 1
      %p69 = por %p67, %p68
      %p70 = scmp.ne.s32.totalorder %s59, %s60
      %p71 = scmp.eq.s32.totalorder %s25, 0
      %p72 = por %p70, %p71
      %p73 = scmp.ne.s32.totalorder %s59, %s60
      %p74 = scmp.eq.s32.totalorder %s26, 1
      %p75 = por %p73, %p74
      %p77 = scmp.ne.s32.totalorder %s60, %s76
      %p78 = scmp.eq.s32.totalorder %s26, 0
      %p79 = por %p77, %p78
      %s81 = sadd.s32 %s80, 1
      %p84 = scmp.eq.s32.totalorder %s20, 1
      %p85 = scmp.ne.s32.totalorder %s80, %s82
      %p86 = scmp.eq.s32.totalorder %s20, 0
      %p87 = por %p85, %p86
      %p88 = scmp.ne.s32.totalorder %s80, %s82
      %p89 = scmp.eq.s32.totalorder %s25, 1
      %p90 = por %p88, %p89
      %p91 = scmp.ne.s32.totalorder %s82, %s83
      %p92 = scmp.eq.s32.totalorder %s25, 0
      %p93 = por %p91, %p92
      %p94 = scmp.ne.s32.totalorder %s82, %s83
      %p95 = scmp.eq.s32.totalorder %s26, 1
      %p96 = por %p94, %p95
      %p98 = scmp.ne.s32.totalorder %s83, %s97
      %p99 = scmp.eq.s32.totalorder %s26, 0
      %p100 = por %p98, %p99
      %s102 = sadd.s32 %s101, 1
      %p105 = scmp.eq.s32.totalorder %s20, 1
      %p106 = scmp.ne.s32.totalorder %s101, %s103
      %p107 = scmp.eq.s32.totalorder %s20, 0
      %p108 = por %p106, %p107
      %p109 = scmp.ne.s32.totalorder %s101, %s103
      %p110 = scmp.eq.s32.totalorder %s25, 1
      %p111 = por %p109, %p110
      %p112 = scmp.ne.s32.totalorder %s103, %s104
      %p113 = scmp.eq.s32.totalorder %s25, 0
      %p114 = por %p112, %p113
      %p115 = scmp.ne.s32.totalorder %s103, %s104
      %p116 = scmp.eq.s32.totalorder %s26, 1
      %p117 = por %p115, %p116
      %p119 = scmp.ne.s32.totalorder %s104, %s118
      %p120 = scmp.eq.s32.totalorder %s26, 0
      %p121 = por %p119, %p120
      %s122 = ssub.s32 %s20, %s27
      %p123 = scmp.eq.s32.totalorder %s122, 0
      %s125 = sadd.s32 %s124, 1
      %s126 = scalar_select %p123, %s124, %s125
      %p129 = pneg %p123
      %p130 = scmp.eq.s32.totalorder %s20, 1
      %p131 = por %p129, %p130
      %p132 = scmp.ne.s32.totalorder %s124, %s127
      %p133 = scmp.eq.s32.totalorder %s20, 0
      %p134 = por %p132, %p133
      %p135 = scmp.ne.s32.totalorder %s124, %s127
      %p136 = scmp.eq.s32.totalorder %s25, 1
      %p137 = por %p135, %p136
      %p138 = scmp.ne.s32.totalorder %s127, %s128
      %p139 = scmp.eq.s32.totalorder %s25, 0
      %p140 = por %p138, %p139
      %p141 = scmp.ne.s32.totalorder %s127, %s128
      %p142 = scmp.eq.s32.totalorder %s26, 1
      %p143 = por %p141, %p142
      %p145 = scmp.ne.s32.totalorder %s128, %s144
      %p146 = scmp.eq.s32.totalorder %s26, 0
      %p147 = por %p145, %p146
      %p148 = scmp.le.s32.totalorder 1, %s20
      %p149 = scmp.lt.s32.totalorder %s20, 3
      %p150 = pnand %p148, %p149
      %p151 = pneg %p150
      // Predicated region
      $region9: #{tpu_custom_call.1} parent=5 // pred_check
        _
      $region10: #{tpu_custom_call.1} parent=5 // pred_check_branch
        %153 = sbr.rel (%p150) target = $region12
      $region11: #{tpu_custom_call.1} parent=5 // pred_region
        %s154 = ssub.s32 %s20, 1
        // Predicated region
        $region13: #{tpu_custom_call.1} parent=11 // pred_check
          %p155 = pneg %p93
        $region14: #{tpu_custom_call.1} parent=11 // pred_check_branch
          %157 = sbr.rel (%p155) target = $region16
        $region15: #{tpu_custom_call.1} parent=11 // pred_region
          %159 = vsyncadd [#allocation6], 0
          %s160 = sshll.u32 %s2, 4
          %s161 = int_to_ptr.hbm [resolvable:$true] %s160
          %s162 = sshll.u32 [#allocation7], 4
          %s163 = int_to_ptr.vmem [resolvable:$true] %s162
          %168 = dma.hbm_to_vmem [thread:$0]  %s161, 512, %s163, [#allocation6], 128, 128, 8
        $region16: #{tpu_custom_call.1} parent=11 // pred_fallthru
          _
        // Predicated region
        $region17: #{tpu_custom_call.1} parent=11 // pred_check
          %p169 = pneg %p114
        $region18: #{tpu_custom_call.1} parent=11 // pred_check_branch
          %171 = sbr.rel (%p169) target = $region20
        $region19: #{tpu_custom_call.1} parent=11 // pred_region
          %173 = vsyncadd [#allocation9], 0
          %s174 = sshll.u32 %s3, 4
          %s175 = int_to_ptr.hbm [resolvable:$true] %s174
          %s176 = sshll.u32 [#allocation8], 4
          %s177 = int_to_ptr.vmem [resolvable:$true] %s176
          %182 = dma.hbm_to_vmem [thread:$0]  %s175, 1024, %s177, [#allocation9], 64, 64, 4
        $region20: #{tpu_custom_call.1} parent=11 // pred_fallthru
          _
      $region12: #{tpu_custom_call.1} parent=5 // pred_fallthru
        _
      %p183 = scmp.lt.s32.totalorder %s20, 2
      // Predicated region
      $region21: #{tpu_custom_call.1} parent=5 // pred_check
        %p184 = pneg %p183
      $region22: #{tpu_custom_call.1} parent=5 // pred_check_branch
        %186 = sbr.rel (%p184) target = $region24
      $region23: #{tpu_custom_call.1} parent=5 // pred_region
        // Predicated region
        $region25: #{tpu_custom_call.1} parent=23 // pred_check
          %p187 = pneg %p40
        $region26: #{tpu_custom_call.1} parent=23 // pred_check_branch
          %189 = sbr.rel (%p187) target = $region28
        $region27: #{tpu_custom_call.1} parent=23 // pred_region
          %s190 = sand.u32 %s30, 1
          %s191 = scalar_lea.sflag [#allocation3], %s190
          %s192 = sand.u32 %s30, 1
          %s193 = smul.addr %s192, 32
          %s194 = scalar_lea.vmem [#allocation2], %s193
          %s195 = smul.u32 4, %s20
          %197 = vsyncadd %s191, 0
          %s198 = smul.addr %s195, 2
          %s199 = smul.addr %s198, 4
          %s200 = scalar_lea.hbm %s0, %s199
          %s201 = sshll.u32 %s200, 4
          %s202 = int_to_ptr.hbm [resolvable:$true] %s201
          %s203 = sshll.u32 %s194, 4
          %s204 = int_to_ptr.vmem [resolvable:$true] %s203
          %209 = dma.hbm_to_vmem [thread:$0]  %s202, 512, %s204, %s191, 64, 64, 4
        $region28: #{tpu_custom_call.1} parent=23 // pred_fallthru
          _
        // Predicated region
        $region29: #{tpu_custom_call.1} parent=23 // pred_check
          %p210 = pneg %p66
        $region30: #{tpu_custom_call.1} parent=23 // pred_check_branch
          %212 = sbr.rel (%p210) target = $region32
        $region31: #{tpu_custom_call.1} parent=23 // pred_region
          %s213 = sand.u32 %s20, 1
          %s214 = scalar_lea.sflag [#allocation6], %s213
          %s215 = sand.u32 %s56, 1
          %s216 = smul.addr %s215, 32
          %s217 = scalar_lea.vmem [#allocation5], %s216
          %s218 = smul.u32 4, %s20
          %220 = vsyncadd %s214, 0
          %s221 = smul.addr %s218, 2
          %s222 = smul.addr %s221, 4
          %s223 = scalar_lea.hbm %s1, %s222
          %s224 = sshll.u32 %s223, 4
          %s225 = int_to_ptr.hbm [resolvable:$true] %s224
          %s226 = sshll.u32 %s217, 4
          %s227 = int_to_ptr.vmem [resolvable:$true] %s226
          %232 = dma.hbm_to_vmem [thread:$0]  %s225, 512, %s227, %s214, 64, 64, 4
        $region32: #{tpu_custom_call.1} parent=23 // pred_fallthru
          _
      $region24: #{tpu_custom_call.1} parent=5 // pred_fallthru
        _
      %p233 = scmp.le.s32.totalorder 1, %s20
      %p234 = scmp.lt.s32.totalorder %s20, 3
      %p235 = pnand %p233, %p234
      %p236 = pneg %p235
      // Predicated region
      $region33: #{tpu_custom_call.1} parent=5 // pred_check
        _
      $region34: #{tpu_custom_call.1} parent=5 // pred_check_branch
        %238 = sbr.rel (%p235) target = $region36
      $region35: #{tpu_custom_call.1} parent=5 // pred_region
        %s239 = ssub.s32 %s20, 1
        %s240 = sand.u32 %s33, 1
        %s241 = scalar_lea.sflag [#allocation3], %s240
        %s242 = sand.u32 %s33, 1
        %s243 = smul.addr %s242, 32
        %s244 = scalar_lea.vmem [#allocation2], %s243
        // Predicated region
        $region37: #{tpu_custom_call.1} parent=35 // pred_check
          %p245 = pneg %p46
        $region38: #{tpu_custom_call.1} parent=35 // pred_check_branch
          %247 = sbr.rel (%p245) target = $region40
        $region39: #{tpu_custom_call.1} parent=35 // pred_region
          %249 = dma.done %s241, 512
        $region40: #{tpu_custom_call.1} parent=35 // pred_fallthru
          _
        %s250 = sand.u32 %s25, 1
        %s251 = scalar_lea.sflag [#allocation6], %s250
        %s252 = sand.u32 %s59, 1
        %s253 = smul.addr %s252, 32
        %s254 = scalar_lea.vmem [#allocation5], %s253
        // Predicated region
        $region41: #{tpu_custom_call.1} parent=35 // pred_check
          %p255 = pneg %p72
        $region42: #{tpu_custom_call.1} parent=35 // pred_check_branch
          %257 = sbr.rel (%p255) target = $region44
        $region43: #{tpu_custom_call.1} parent=35 // pred_region
          %259 = dma.done %s251, 512
        $region44: #{tpu_custom_call.1} parent=35 // pred_fallthru
          _
        // Predicated region
        $region45: #{tpu_custom_call.1} parent=35 // pred_check
          %p260 = pneg %p93
        $region46: #{tpu_custom_call.1} parent=35 // pred_check_branch
          %262 = sbr.rel (%p260) target = $region48
        $region47: #{tpu_custom_call.1} parent=35 // pred_region
          %264 = dma.done [#allocation6], 512
        $region48: #{tpu_custom_call.1} parent=35 // pred_fallthru
          _
        // Predicated region
        $region49: #{tpu_custom_call.1} parent=35 // pred_check
          %p265 = pneg %p114
        $region50: #{tpu_custom_call.1} parent=35 // pred_check_branch
          %267 = sbr.rel (%p265) target = $region52
        $region51: #{tpu_custom_call.1} parent=35 // pred_region
          %269 = dma.done [#allocation9], 1024
        $region52: #{tpu_custom_call.1} parent=35 // pred_fallthru
          _
        %s270 = sand.u32 %s33, 1
        %s271 = scalar_lea.sflag [#allocation3], %s270
        %s272 = sand.u32 %s33, 1
        %s273 = smul.addr %s272, 32
        %s274 = scalar_lea.vmem [#allocation2], %s273
        %p275 = pneg %p46
        %p276 = pneg %p43
        %s277 = sand.u32 %s25, 1
        %s278 = scalar_lea.sflag [#allocation6], %s277
        %s279 = sand.u32 %s59, 1
        %s280 = smul.addr %s279, 32
        %s281 = scalar_lea.vmem [#allocation5], %s280
        %p282 = pneg %p72
        %p283 = pneg %p69
        %p284 = pneg %p93
        %p285 = pneg %p90
        %p286 = pneg %p114
        %p287 = pneg %p111
        %p288 = pneg %p140
        %p289 = pneg %p137
        %s290 = sand.u32 %s127, 1
        %s291 = scalar_lea.sflag [#allocation4], %s290
        %s292 = sand.u32 %s127, 1
        %s293 = smul.addr %s292, 64
        %s294 = scalar_lea.vmem [#allocation10], %s293
        %s295 = smul.u32 4, %s25
        %s296 = smul.u32 4, %s25
        %s297 = smul.u32 4, %s25
        %v299 = vld [vmem:[%s244] sm:$0xf]
        %v300 = vld [vmem:[%s244 + $0x4] sm:$0xf]
        %v301 = vld [vmem:[%s244 + $0x8] sm:$0xf]
        %v302 = vld [vmem:[%s244 + $0xc] sm:$0xf]
        %v303 = vld [vmem:[%s244 + $0x10] sm:$0xf]
        %v304 = vld [vmem:[%s244 + $0x14] sm:$0xf]
        %v305 = vld [vmem:[%s244 + $0x18] sm:$0xf]
        %v306 = vld [vmem:[%s244 + $0x1c] sm:$0xf]
        %v307 = vld [vmem:[%s254] sm:$0xf]
        %v308 = vld [vmem:[%s254 + $0x4] sm:$0xf]
        %v309 = vld [vmem:[%s254 + $0x8] sm:$0xf]
        %v310 = vld [vmem:[%s254 + $0xc] sm:$0xf]
        %v311 = vld [vmem:[%s254 + $0x10] sm:$0xf]
        %v312 = vld [vmem:[%s254 + $0x14] sm:$0xf]
        %v313 = vld [vmem:[%s254 + $0x18] sm:$0xf]
        %v314 = vld [vmem:[%s254 + $0x1c] sm:$0xf]
        %v315 = vld [vmem:[#allocation7] sm:$0xff]
        %v316 = vld [vmem:[#allocation7 + $0x8] sm:$0xff]
        %v317 = vld [vmem:[#allocation7 + $0x10] sm:$0xff]
        %v318 = vld [vmem:[#allocation7 + $0x18] sm:$0xff]
        %v319 = vld [vmem:[#allocation8] sm:$0xf]
        %v320 = vld [vmem:[#allocation8 + $0x4] sm:$0xf]
        %v321 = vld [vmem:[#allocation8 + $0x8] sm:$0xf]
        %v322 = vld [vmem:[#allocation8 + $0xc] sm:$0xf]
        %v323 = vld [vmem:[#allocation8 + $0x10] sm:$0xf]
        %v324 = vld [vmem:[#allocation8 + $0x14] sm:$0xf]
        %v325 = vld [vmem:[#allocation8 + $0x18] sm:$0xf]
        %v326 = vld [vmem:[#allocation8 + $0x1c] sm:$0xf]
        %v327 = vld [vmem:[#allocation8 + $0x20] sm:$0xf]
        %v328 = vld [vmem:[#allocation8 + $0x24] sm:$0xf]
        %v329 = vld [vmem:[#allocation8 + $0x28] sm:$0xf]
        %v330 = vld [vmem:[#allocation8 + $0x2c] sm:$0xf]
        %v331 = vld [vmem:[#allocation8 + $0x30] sm:$0xf]
        %v332 = vld [vmem:[#allocation8 + $0x34] sm:$0xf]
        %v333 = vld [vmem:[#allocation8 + $0x38] sm:$0xf]
        %v334 = vld [vmem:[#allocation8 + $0x3c] sm:$0xf]
        %v343 = vunpack.c.l.b16 %v307
        %v344 = vunpack.c.l.b16 %v308
        %v345 = vunpack.c.l.b16 %v309
        %v346 = vunpack.c.l.b16 %v310
        %v347 = vunpack.c.l.b16 %v311
        %v348 = vunpack.c.l.b16 %v312
        %v349 = vunpack.c.l.b16 %v313
        %v350 = vunpack.c.l.b16 %v314
        %v351 = vpack.c.b16 %v344, %v343
        %v352 = vpack.c.b16 %v346, %v345
        %v353 = vpack.c.b16 %v348, %v347
        %v354 = vpack.c.b16 %v350, %v349
        %v359 = vunpack.c.l.b16 %v315
        %v360 = vunpack.c.h.b16 %v315
        %v361 = vunpack.c.l.b16 %v316
        %v362 = vunpack.c.h.b16 %v316
        %v363 = vunpack.c.l.b16 %v317
        %v364 = vunpack.c.h.b16 %v317
        %v365 = vunpack.c.l.b16 %v318
        %v366 = vunpack.c.h.b16 %v318
        %v367 = vpack.c.b16 %v361, %v359
        %v368 = vpack.c.b16 %v362, %v360
        %v369 = vpack.c.b16 %v365, %v363
        %v370 = vpack.c.b16 %v366, %v364
        %vm375 = vcmask 261120
        %v377 = vsel %vm375, %v351, 0
        %v380 = vsel %vm375, %v352, 0
        %v383 = vsel %vm375, %v353, 0
        %v386 = vsel %vm375, %v354, 0
        %388 = vmatpush.bf16.msra.mxu0 0
        %389 = vmatpush.bf16.msra.mxu0 0
        %390 = vmatpush.bf16.msra.mxu0 0
        %391 = vmatpush.bf16.msra.mxu0 0
        %392 = vmatpush.bf16.msra.mxu0 0
        %393 = vmatpush.bf16.msra.mxu0 0
        %394 = vmatpush.bf16.msra.mxu0 %v369
        %395 = vmatpush.bf16.msra.mxu0 %v367
        %396 = vmatmul.bf16.gmra.mxu0 %v377
        %v397 = vpop.f32.mrf.mxu0
        %v398 = vadd.f32 0.0, %v397
        %v399 = vpop.f32.mrf.mxu0
        %v400 = vadd.f32 0.0, %v399
        %401 = vmatmul.bf16.gmra.mxu0 %v380
        %v402 = vpop.f32.mrf.mxu0
        %v403 = vadd.f32 0.0, %v402
        %v404 = vpop.f32.mrf.mxu0
        %v405 = vadd.f32 0.0, %v404
        %406 = vmatmul.bf16.gmra.mxu0 %v383
        %v407 = vpop.f32.mrf.mxu0
        %v408 = vadd.f32 0.0, %v407
        %v409 = vpop.f32.mrf.mxu0
        %v410 = vadd.f32 0.0, %v409
        %411 = vmatmul.bf16.gmra.mxu0 %v386
        %v412 = vpop.f32.mrf.mxu0
        %v413 = vadd.f32 0.0, %v412
        %v414 = vpop.f32.mrf.mxu0
        %v415 = vadd.f32 0.0, %v414
        %416 = vdwg.mxu0
        %417 = vmatpush.bf16.msra.mxu0 0
        %418 = vmatpush.bf16.msra.mxu0 0
        %419 = vmatpush.bf16.msra.mxu0 0
        %420 = vmatpush.bf16.msra.mxu0 0
        %421 = vmatpush.bf16.msra.mxu0 0
        %422 = vmatpush.bf16.msra.mxu0 0
        %423 = vmatpush.bf16.msra.mxu0 %v370
        %424 = vmatpush.bf16.msra.mxu0 %v368
        %425 = vmatmul.bf16.gmra.mxu0 %v377
        %v426 = vpop.f32.mrf.mxu0
        %v427 = vadd.f32 0.0, %v426
        %v428 = vpop.f32.mrf.mxu0
        %v429 = vadd.f32 0.0, %v428
        %430 = vmatmul.bf16.gmra.mxu0 %v380
        %v431 = vpop.f32.mrf.mxu0
        %v432 = vadd.f32 0.0, %v431
        %v433 = vpop.f32.mrf.mxu0
        %v434 = vadd.f32 0.0, %v433
        %435 = vmatmul.bf16.gmra.mxu0 %v383
        %v436 = vpop.f32.mrf.mxu0
        %v437 = vadd.f32 0.0, %v436
        %v438 = vpop.f32.mrf.mxu0
        %v439 = vadd.f32 0.0, %v438
        %440 = vmatmul.bf16.gmra.mxu0 %v386
        %v441 = vpop.f32.mrf.mxu0
        %v442 = vadd.f32 0.0, %v441
        %v443 = vpop.f32.mrf.mxu0
        %v444 = vadd.f32 0.0, %v443
        %445 = vdwg.mxu0
        %v446 = vpack.c.bf16 %v398, %v398
        %v447 = vpack.c.bf16 %v400, %v400
        %v448 = vpack.c.bf16 %v403, %v403
        %v449 = vpack.c.bf16 %v405, %v405
        %v450 = vpack.c.bf16 %v408, %v408
        %v451 = vpack.c.bf16 %v410, %v410
        %v452 = vpack.c.bf16 %v413, %v413
        %v453 = vpack.c.bf16 %v415, %v415
        %v456 = vunpack.c.l.b16 %v299
        %v457 = vunpack.c.l.b16 %v300
        %v458 = vpack.c.b16 %v457, %v456
        %v461 = vunpack.c.l.b16 %v446
        %v462 = vunpack.c.l.b16 %v447
        %v463 = vpack.c.b16 %v462, %v461
        %vm465 = vcmask 130048
        %v467 = vsel %vm465, %v458, 0
        %469 = vmatpush.bf16.msra.mxu0 0
        %470 = vmatpush.bf16.msra.mxu0 0
        %471 = vmatpush.bf16.msra.mxu0 0
        %472 = vmatpush.bf16.msra.mxu0 0
        %473 = vmatpush.bf16.msra.mxu0 0
        %474 = vmatpush.bf16.msra.mxu0 0
        %475 = vmatpush.bf16.msra.mxu0 0
        %476 = vmatpush.bf16.msra.mxu0 %v463
        %477 = vmatmul.bf16.gmra.mxu0 %v467
        %v478 = vpop.f32.mrf.mxu0
        %v479 = vadd.f32 0.0, %v478
        %v480 = vpop.f32.mrf.mxu0
        %v481 = vadd.f32 0.0, %v480
        %482 = vdwg.mxu0
        %v485 = vunpack.c.l.b16 %v301
        %v486 = vunpack.c.l.b16 %v302
        %v487 = vpack.c.b16 %v486, %v485
        %v490 = vunpack.c.l.b16 %v448
        %v491 = vunpack.c.l.b16 %v449
        %v492 = vpack.c.b16 %v491, %v490
        %v495 = vsel %vm465, %v487, 0
        %497 = vmatpush.bf16.msra.mxu0 0
        %498 = vmatpush.bf16.msra.mxu0 0
        %499 = vmatpush.bf16.msra.mxu0 0
        %500 = vmatpush.bf16.msra.mxu0 0
        %501 = vmatpush.bf16.msra.mxu0 0
        %502 = vmatpush.bf16.msra.mxu0 0
        %503 = vmatpush.bf16.msra.mxu0 0
        %504 = vmatpush.bf16.msra.mxu0 %v492
        %505 = vmatmul.bf16.gmra.mxu0 %v495
        %v506 = vpop.f32.mrf.mxu0
        %v507 = vadd.f32 0.0, %v506
        %v508 = vpop.f32.mrf.mxu0
        %v509 = vadd.f32 0.0, %v508
        %510 = vdwg.mxu0
        %v513 = vunpack.c.l.b16 %v303
        %v514 = vunpack.c.l.b16 %v304
        %v515 = vpack.c.b16 %v514, %v513
        %v518 = vunpack.c.l.b16 %v450
        %v519 = vunpack.c.l.b16 %v451
        %v520 = vpack.c.b16 %v519, %v518
        %v523 = vsel %vm465, %v515, 0
        %525 = vmatpush.bf16.msra.mxu0 0
        %526 = vmatpush.bf16.msra.mxu0 0
        %527 = vmatpush.bf16.msra.mxu0 0
        %528 = vmatpush.bf16.msra.mxu0 0
        %529 = vmatpush.bf16.msra.mxu0 0
        %530 = vmatpush.bf16.msra.mxu0 0
        %531 = vmatpush.bf16.msra.mxu0 0
        %532 = vmatpush.bf16.msra.mxu0 %v520
        %533 = vmatmul.bf16.gmra.mxu0 %v523
        %v534 = vpop.f32.mrf.mxu0
        %v535 = vadd.f32 0.0, %v534
        %v536 = vpop.f32.mrf.mxu0
        %v537 = vadd.f32 0.0, %v536
        %538 = vdwg.mxu0
        %v541 = vunpack.c.l.b16 %v305
        %v542 = vunpack.c.l.b16 %v306
        %v543 = vpack.c.b16 %v542, %v541
        %v546 = vunpack.c.l.b16 %v452
        %v547 = vunpack.c.l.b16 %v453
        %v548 = vpack.c.b16 %v547, %v546
        %v551 = vsel %vm465, %v543, 0
        %553 = vmatpush.bf16.msra.mxu0 0
        %554 = vmatpush.bf16.msra.mxu0 0
        %555 = vmatpush.bf16.msra.mxu0 0
        %556 = vmatpush.bf16.msra.mxu0 0
        %557 = vmatpush.bf16.msra.mxu0 0
        %558 = vmatpush.bf16.msra.mxu0 0
        %559 = vmatpush.bf16.msra.mxu0 0
        %560 = vmatpush.bf16.msra.mxu0 %v548
        %561 = vmatmul.bf16.gmra.mxu0 %v551
        %v562 = vpop.f32.mrf.mxu0
        %v563 = vadd.f32 0.0, %v562
        %v564 = vpop.f32.mrf.mxu0
        %v565 = vadd.f32 0.0, %v564
        %566 = vdwg.mxu0
        %v567 = vadd.f32 %v479, %v481
        %v568 = vrot.slane %v567, 4
        %v569 = vadd.f32 %v567, %v568
        %v570 = vrot.slane %v569, 2
        %v571 = vadd.f32 %v569, %v570
        %v572 = vrot.slane %v571, 1
        %v573 = vadd.f32 %v571, %v572
        %v574 = vadd.f32 %v507, %v509
        %v575 = vrot.slane %v574, 4
        %v576 = vadd.f32 %v574, %v575
        %v577 = vrot.slane %v576, 2
        %v578 = vadd.f32 %v576, %v577
        %v579 = vrot.slane %v578, 1
        %v580 = vadd.f32 %v578, %v579
        %v581 = vadd.f32 %v535, %v537
        %v582 = vrot.slane %v581, 4
        %v583 = vadd.f32 %v581, %v582
        %v584 = vrot.slane %v583, 2
        %v585 = vadd.f32 %v583, %v584
        %v586 = vrot.slane %v585, 1
        %v587 = vadd.f32 %v585, %v586
        %v588 = vadd.f32 %v563, %v565
        %v589 = vrot.slane %v588, 4
        %v590 = vadd.f32 %v588, %v589
        %v591 = vrot.slane %v590, 2
        %v592 = vadd.f32 %v590, %v591
        %v593 = vrot.slane %v592, 1
        %v594 = vadd.f32 %v592, %v593
        %v595 = vrcp.pop 16.0
        %v596 = vmul.f32 16.0, %v595
        %v597 = vsub.f32 1.0, %v596
        %v598 = vmul.f32 %v595, %v597
        %v599 = vadd.f32 %v595, %v598
        %vm600 = vweird.f32 %v595
        %v601 = vsel %vm600, %v595, %v599
        %v602 = vmul.f32 %v573, %v601
        %v603 = vmul.f32 %v580, %v601
        %v604 = vmul.f32 %v587, %v601
        %v605 = vmul.f32 %v594, %v601
        %v606 = vmul.f32 %v479, %v479
        %v607 = vmul.f32 %v481, %v481
        %v608 = vmul.f32 %v507, %v507
        %v609 = vmul.f32 %v509, %v509
        %v610 = vmul.f32 %v535, %v535
        %v611 = vmul.f32 %v537, %v537
        %v612 = vmul.f32 %v563, %v563
        %v613 = vmul.f32 %v565, %v565
        %v614 = vadd.f32 %v606, %v607
        %v615 = vrot.slane %v614, 4
        %v616 = vadd.f32 %v614, %v615
        %v617 = vrot.slane %v616, 2
        %v618 = vadd.f32 %v616, %v617
        %v619 = vrot.slane %v618, 1
        %v620 = vadd.f32 %v618, %v619
        %v621 = vadd.f32 %v608, %v609
        %v622 = vrot.slane %v621, 4
        %v623 = vadd.f32 %v621, %v622
        %v624 = vrot.slane %v623, 2
        %v625 = vadd.f32 %v623, %v624
        %v626 = vrot.slane %v625, 1
        %v627 = vadd.f32 %v625, %v626
        %v628 = vadd.f32 %v610, %v611
        %v629 = vrot.slane %v628, 4
        %v630 = vadd.f32 %v628, %v629
        %v631 = vrot.slane %v630, 2
        %v632 = vadd.f32 %v630, %v631
        %v633 = vrot.slane %v632, 1
        %v634 = vadd.f32 %v632, %v633
        %v635 = vadd.f32 %v612, %v613
        %v636 = vrot.slane %v635, 4
        %v637 = vadd.f32 %v635, %v636
        %v638 = vrot.slane %v637, 2
        %v639 = vadd.f32 %v637, %v638
        %v640 = vrot.slane %v639, 1
        %v641 = vadd.f32 %v639, %v640
        %v642 = vmul.f32 %v620, %v601
        %v643 = vmul.f32 %v627, %v601
        %v644 = vmul.f32 %v634, %v601
        %v645 = vmul.f32 %v641, %v601
        %v646 = vmul.f32 %v602, %v602
        %v647 = vmul.f32 %v603, %v603
        %v648 = vmul.f32 %v604, %v604
        %v649 = vmul.f32 %v605, %v605
        %v650 = vsub.f32 %v642, %v646
        %v651 = vsub.f32 %v643, %v647
        %v652 = vsub.f32 %v644, %v648
        %v653 = vsub.f32 %v645, %v649
        %v654 = vmax.f32 %v650, 0.0
        %v655 = vmax.f32 %v651, 0.0
        %v656 = vmax.f32 %v652, 0.0
        %v657 = vmax.f32 %v653, 0.0
        %v658 = vsub.f32 %v479, %v602
        %v659 = vsub.f32 %v481, %v602
        %v660 = vsub.f32 %v507, %v603
        %v661 = vsub.f32 %v509, %v603
        %v662 = vsub.f32 %v535, %v604
        %v663 = vsub.f32 %v537, %v604
        %v664 = vsub.f32 %v563, %v605
        %v665 = vsub.f32 %v565, %v605
        %v666 = vadd.f32 %v654, 1e-05
        %v667 = vadd.f32 %v655, 1e-05
        %v668 = vadd.f32 %v656, 1e-05
        %v669 = vadd.f32 %v657, 1e-05
        %v670 = vrsqrt.pop %v666
        %v671 = vmul.f32 %v670, %v666
        %v672 = vmul.f32 %v671, %v670
        %v673 = vmul.f32 0.5, %v672
        %v674 = vsub.f32 1.5, %v673
        %v675 = vmul.f32 %v670, %v674
        %vm676 = vweird.f32 %v666
        %vm677 = vweird.f32 %v670
        %vm678 = vmor %vm676, %vm677
        %v679 = vsel %vm678, %v670, %v675
        %v680 = vrsqrt.pop %v667
        %v681 = vmul.f32 %v680, %v667
        %v682 = vmul.f32 %v681, %v680
        %v683 = vmul.f32 0.5, %v682
        %v684 = vsub.f32 1.5, %v683
        %v685 = vmul.f32 %v680, %v684
        %vm686 = vweird.f32 %v667
        %vm687 = vweird.f32 %v680
        %vm688 = vmor %vm686, %vm687
        %v689 = vsel %vm688, %v680, %v685
        %v690 = vrsqrt.pop %v668
        %v691 = vmul.f32 %v690, %v668
        %v692 = vmul.f32 %v691, %v690
        %v693 = vmul.f32 0.5, %v692
        %v694 = vsub.f32 1.5, %v693
        %v695 = vmul.f32 %v690, %v694
        %vm696 = vweird.f32 %v668
        %vm697 = vweird.f32 %v690
        %vm698 = vmor %vm696, %vm697
        %v699 = vsel %vm698, %v690, %v695
        %v700 = vrsqrt.pop %v669
        %v701 = vmul.f32 %v700, %v669
        %v702 = vmul.f32 %v701, %v700
        %v703 = vmul.f32 0.5, %v702
        %v704 = vsub.f32 1.5, %v703
        %v705 = vmul.f32 %v700, %v704
        %vm706 = vweird.f32 %v669
        %vm707 = vweird.f32 %v700
        %vm708 = vmor %vm706, %vm707
        %v709 = vsel %vm708, %v700, %v705
        %v710 = vmul.f32 %v658, %v679
        %v711 = vmul.f32 %v659, %v679
        %v712 = vmul.f32 %v660, %v689
        %v713 = vmul.f32 %v661, %v689
        %v714 = vmul.f32 %v662, %v699
        %v715 = vmul.f32 %v663, %v699
        %v716 = vmul.f32 %v664, %v709
        %v717 = vmul.f32 %v665, %v709
        %v718 = vmax.f32 %v710, 0.0
        %v719 = vmax.f32 %v711, 0.0
        %v720 = vmax.f32 %v712, 0.0
        %v721 = vmax.f32 %v713, 0.0
        %v722 = vmax.f32 %v714, 0.0
        %v723 = vmax.f32 %v715, 0.0
        %v724 = vmax.f32 %v716, 0.0
        %v725 = vmax.f32 %v717, 0.0
        %v726 = vpack.c.bf16 %v719, %v718
        %v727 = vpack.c.bf16 %v721, %v720
        %v728 = vpack.c.bf16 %v723, %v722
        %v729 = vpack.c.bf16 %v725, %v724
        %v746 = vunpack.c.l.b16 %v319
        %v747 = vunpack.c.l.b16 %v320
        %v748 = vunpack.c.l.b16 %v321
        %v749 = vunpack.c.l.b16 %v322
        %v750 = vunpack.c.l.b16 %v323
        %v751 = vunpack.c.l.b16 %v324
        %v752 = vunpack.c.l.b16 %v325
        %v753 = vunpack.c.l.b16 %v326
        %v754 = vunpack.c.l.b16 %v327
        %v755 = vunpack.c.l.b16 %v328
        %v756 = vunpack.c.l.b16 %v329
        %v757 = vunpack.c.l.b16 %v330
        %v758 = vunpack.c.l.b16 %v331
        %v759 = vunpack.c.l.b16 %v332
        %v760 = vunpack.c.l.b16 %v333
        %v761 = vunpack.c.l.b16 %v334
        %v762 = vpack.c.b16 %v747, %v746
        %v763 = vpack.c.b16 %v749, %v748
        %v764 = vpack.c.b16 %v751, %v750
        %v765 = vpack.c.b16 %v753, %v752
        %v766 = vpack.c.b16 %v755, %v754
        %v767 = vpack.c.b16 %v757, %v756
        %v768 = vpack.c.b16 %v759, %v758
        %v769 = vpack.c.b16 %v761, %v760
        %778 = vmatpush.bf16.msra.mxu0 %v769
        %779 = vmatpush.bf16.msra.mxu0 %v768
        %780 = vmatpush.bf16.msra.mxu0 %v767
        %781 = vmatpush.bf16.msra.mxu0 %v766
        %782 = vmatpush.bf16.msra.mxu0 %v765
        %783 = vmatpush.bf16.msra.mxu0 %v764
        %784 = vmatpush.bf16.msra.mxu0 %v763
        %785 = vmatpush.bf16.msra.mxu0 %v762
        %786 = vmatmul.bf16.gmra.mxu0 %v726
        %v787 = vpop.f32.mrf.mxu0
        %v788 = vadd.f32 0.0, %v787
        %v789 = vpop.f32.mrf.mxu0
        %v790 = vadd.f32 0.0, %v789
        %791 = vmatmul.bf16.gmra.mxu0 %v727
        %v792 = vpop.f32.mrf.mxu0
        %v793 = vadd.f32 0.0, %v792
        %v794 = vpop.f32.mrf.mxu0
        %v795 = vadd.f32 0.0, %v794
        %796 = vmatmul.bf16.gmra.mxu0 %v728
        %v797 = vpop.f32.mrf.mxu0
        %v798 = vadd.f32 0.0, %v797
        %v799 = vpop.f32.mrf.mxu0
        %v800 = vadd.f32 0.0, %v799
        %801 = vmatmul.bf16.gmra.mxu0 %v729
        %v802 = vpop.f32.mrf.mxu0
        %v803 = vadd.f32 0.0, %v802
        %v804 = vpop.f32.mrf.mxu0
        %v805 = vadd.f32 0.0, %v804
        %806 = vdwg.mxu0
        %v807 = vadd.f32 %v788, %v790
        %v808 = vrot.slane %v807, 4
        %v809 = vadd.f32 %v807, %v808
        %v810 = vrot.slane %v809, 2
        %v811 = vadd.f32 %v809, %v810
        %v812 = vrot.slane %v811, 1
        %v813 = vadd.f32 %v811, %v812
        %v814 = vadd.f32 %v793, %v795
        %v815 = vrot.slane %v814, 4
        %v816 = vadd.f32 %v814, %v815
        %v817 = vrot.slane %v816, 2
        %v818 = vadd.f32 %v816, %v817
        %v819 = vrot.slane %v818, 1
        %v820 = vadd.f32 %v818, %v819
        %v821 = vadd.f32 %v798, %v800
        %v822 = vrot.slane %v821, 4
        %v823 = vadd.f32 %v821, %v822
        %v824 = vrot.slane %v823, 2
        %v825 = vadd.f32 %v823, %v824
        %v826 = vrot.slane %v825, 1
        %v827 = vadd.f32 %v825, %v826
        %v828 = vadd.f32 %v803, %v805
        %v829 = vrot.slane %v828, 4
        %v830 = vadd.f32 %v828, %v829
        %v831 = vrot.slane %v830, 2
        %v832 = vadd.f32 %v830, %v831
        %v833 = vrot.slane %v832, 1
        %v834 = vadd.f32 %v832, %v833
        %v835 = vmul.f32 %v813, %v601
        %v836 = vmul.f32 %v820, %v601
        %v837 = vmul.f32 %v827, %v601
        %v838 = vmul.f32 %v834, %v601
        %v839 = vmul.f32 %v788, %v788
        %v840 = vmul.f32 %v790, %v790
        %v841 = vmul.f32 %v793, %v793
        %v842 = vmul.f32 %v795, %v795
        %v843 = vmul.f32 %v798, %v798
        %v844 = vmul.f32 %v800, %v800
        %v845 = vmul.f32 %v803, %v803
        %v846 = vmul.f32 %v805, %v805
        %v847 = vadd.f32 %v839, %v840
        %v848 = vrot.slane %v847, 4
        %v849 = vadd.f32 %v847, %v848
        %v850 = vrot.slane %v849, 2
        %v851 = vadd.f32 %v849, %v850
        %v852 = vrot.slane %v851, 1
        %v853 = vadd.f32 %v851, %v852
        %v854 = vadd.f32 %v841, %v842
        %v855 = vrot.slane %v854, 4
        %v856 = vadd.f32 %v854, %v855
        %v857 = vrot.slane %v856, 2
        %v858 = vadd.f32 %v856, %v857
        %v859 = vrot.slane %v858, 1
        %v860 = vadd.f32 %v858, %v859
        %v861 = vadd.f32 %v843, %v844
        %v862 = vrot.slane %v861, 4
        %v863 = vadd.f32 %v861, %v862
        %v864 = vrot.slane %v863, 2
        %v865 = vadd.f32 %v863, %v864
        %v866 = vrot.slane %v865, 1
        %v867 = vadd.f32 %v865, %v866
        %v868 = vadd.f32 %v845, %v846
        %v869 = vrot.slane %v868, 4
        %v870 = vadd.f32 %v868, %v869
        %v871 = vrot.slane %v870, 2
        %v872 = vadd.f32 %v870, %v871
        %v873 = vrot.slane %v872, 1
        %v874 = vadd.f32 %v872, %v873
        %v875 = vmul.f32 %v853, %v601
        %v876 = vmul.f32 %v860, %v601
        %v877 = vmul.f32 %v867, %v601
        %v878 = vmul.f32 %v874, %v601
        %v879 = vmul.f32 %v835, %v835
        %v880 = vmul.f32 %v836, %v836
        %v881 = vmul.f32 %v837, %v837
        %v882 = vmul.f32 %v838, %v838
        %v883 = vsub.f32 %v875, %v879
        %v884 = vsub.f32 %v876, %v880
        %v885 = vsub.f32 %v877, %v881
        %v886 = vsub.f32 %v878, %v882
        %v887 = vmax.f32 %v883, 0.0
        %v888 = vmax.f32 %v884, 0.0
        %v889 = vmax.f32 %v885, 0.0
        %v890 = vmax.f32 %v886, 0.0
        %v891 = vsub.f32 %v788, %v835
        %v892 = vsub.f32 %v790, %v835
        %v893 = vsub.f32 %v793, %v836
        %v894 = vsub.f32 %v795, %v836
        %v895 = vsub.f32 %v798, %v837
        %v896 = vsub.f32 %v800, %v837
        %v897 = vsub.f32 %v803, %v838
        %v898 = vsub.f32 %v805, %v838
        %v899 = vadd.f32 %v887, 1e-05
        %v900 = vadd.f32 %v888, 1e-05
        %v901 = vadd.f32 %v889, 1e-05
        %v902 = vadd.f32 %v890, 1e-05
        %v903 = vrsqrt.pop %v899
        %v904 = vmul.f32 %v903, %v899
        %v905 = vmul.f32 %v904, %v903
        %v906 = vmul.f32 0.5, %v905
        %v907 = vsub.f32 1.5, %v906
        %v908 = vmul.f32 %v903, %v907
        %vm909 = vweird.f32 %v899
        %vm910 = vweird.f32 %v903
        %vm911 = vmor %vm909, %vm910
        %v912 = vsel %vm911, %v903, %v908
        %v913 = vrsqrt.pop %v900
        %v914 = vmul.f32 %v913, %v900
        %v915 = vmul.f32 %v914, %v913
        %v916 = vmul.f32 0.5, %v915
        %v917 = vsub.f32 1.5, %v916
        %v918 = vmul.f32 %v913, %v917
        %vm919 = vweird.f32 %v900
        %vm920 = vweird.f32 %v913
        %vm921 = vmor %vm919, %vm920
        %v922 = vsel %vm921, %v913, %v918
        %v923 = vrsqrt.pop %v901
        %v924 = vmul.f32 %v923, %v901
        %v925 = vmul.f32 %v924, %v923
        %v926 = vmul.f32 0.5, %v925
        %v927 = vsub.f32 1.5, %v926
        %v928 = vmul.f32 %v923, %v927
        %vm929 = vweird.f32 %v901
        %vm930 = vweird.f32 %v923
        %vm931 = vmor %vm929, %vm930
        %v932 = vsel %vm931, %v923, %v928
        %v933 = vrsqrt.pop %v902
        %v934 = vmul.f32 %v933, %v902
        %v935 = vmul.f32 %v934, %v933
        %v936 = vmul.f32 0.5, %v935
        %v937 = vsub.f32 1.5, %v936
        %v938 = vmul.f32 %v933, %v937
        %vm939 = vweird.f32 %v902
        %vm940 = vweird.f32 %v933
        %vm941 = vmor %vm939, %vm940
        %v942 = vsel %vm941, %v933, %v938
        %v943 = vmul.f32 %v891, %v912
        %v944 = vmul.f32 %v892, %v912
        %v945 = vmul.f32 %v893, %v922
        %v946 = vmul.f32 %v894, %v922
        %v947 = vmul.f32 %v895, %v932
        %v948 = vmul.f32 %v896, %v932
        %v949 = vmul.f32 %v897, %v942
        %v950 = vmul.f32 %v898, %v942
        %v951 = vadd.f32 %v427, %v429
        %v952 = vrot.slane %v951, 4
        %v953 = vadd.f32 %v951, %v952
        %v954 = vrot.slane %v953, 2
        %v955 = vadd.f32 %v953, %v954
        %v956 = vrot.slane %v955, 1
        %v957 = vadd.f32 %v955, %v956
        %v958 = vadd.f32 %v432, %v434
        %v959 = vrot.slane %v958, 4
        %v960 = vadd.f32 %v958, %v959
        %v961 = vrot.slane %v960, 2
        %v962 = vadd.f32 %v960, %v961
        %v963 = vrot.slane %v962, 1
        %v964 = vadd.f32 %v962, %v963
        %v965 = vadd.f32 %v437, %v439
        %v966 = vrot.slane %v965, 4
        %v967 = vadd.f32 %v965, %v966
        %v968 = vrot.slane %v967, 2
        %v969 = vadd.f32 %v967, %v968
        %v970 = vrot.slane %v969, 1
        %v971 = vadd.f32 %v969, %v970
        %v972 = vadd.f32 %v442, %v444
        %v973 = vrot.slane %v972, 4
        %v974 = vadd.f32 %v972, %v973
        %v975 = vrot.slane %v974, 2
        %v976 = vadd.f32 %v974, %v975
        %v977 = vrot.slane %v976, 1
        %v978 = vadd.f32 %v976, %v977
        %v979 = vmul.f32 %v957, %v601
        %v980 = vmul.f32 %v964, %v601
        %v981 = vmul.f32 %v971, %v601
        %v982 = vmul.f32 %v978, %v601
        %v983 = vmul.f32 %v427, %v427
        %v984 = vmul.f32 %v429, %v429
        %v985 = vmul.f32 %v432, %v432
        %v986 = vmul.f32 %v434, %v434
        %v987 = vmul.f32 %v437, %v437
        %v988 = vmul.f32 %v439, %v439
        %v989 = vmul.f32 %v442, %v442
        %v990 = vmul.f32 %v444, %v444
        %v991 = vadd.f32 %v983, %v984
        %v992 = vrot.slane %v991, 4
        %v993 = vadd.f32 %v991, %v992
        %v994 = vrot.slane %v993, 2
        %v995 = vadd.f32 %v993, %v994
        %v996 = vrot.slane %v995, 1
        %v997 = vadd.f32 %v995, %v996
        %v998 = vadd.f32 %v985, %v986
        %v999 = vrot.slane %v998, 4
        %v1000 = vadd.f32 %v998, %v999
        %v1001 = vrot.slane %v1000, 2
        %v1002 = vadd.f32 %v1000, %v1001
        %v1003 = vrot.slane %v1002, 1
        %v1004 = vadd.f32 %v1002, %v1003
        %v1005 = vadd.f32 %v987, %v988
        %v1006 = vrot.slane %v1005, 4
        %v1007 = vadd.f32 %v1005, %v1006
        %v1008 = vrot.slane %v1007, 2
        %v1009 = vadd.f32 %v1007, %v1008
        %v1010 = vrot.slane %v1009, 1
        %v1011 = vadd.f32 %v1009, %v1010
        %v1012 = vadd.f32 %v989, %v990
        %v1013 = vrot.slane %v1012, 4
        %v1014 = vadd.f32 %v1012, %v1013
        %v1015 = vrot.slane %v1014, 2
        %v1016 = vadd.f32 %v1014, %v1015
        %v1017 = vrot.slane %v1016, 1
        %v1018 = vadd.f32 %v1016, %v1017
        %v1019 = vmul.f32 %v997, %v601
        %v1020 = vmul.f32 %v1004, %v601
        %v1021 = vmul.f32 %v1011, %v601
        %v1022 = vmul.f32 %v1018, %v601
        %v1023 = vmul.f32 %v979, %v979
        %v1024 = vmul.f32 %v980, %v980
        %v1025 = vmul.f32 %v981, %v981
        %v1026 = vmul.f32 %v982, %v982
        %v1027 = vsub.f32 %v1019, %v1023
        %v1028 = vsub.f32 %v1020, %v1024
        %v1029 = vsub.f32 %v1021, %v1025
        %v1030 = vsub.f32 %v1022, %v1026
        %v1031 = vmax.f32 %v1027, 0.0
        %v1032 = vmax.f32 %v1028, 0.0
        %v1033 = vmax.f32 %v1029, 0.0
        %v1034 = vmax.f32 %v1030, 0.0
        %v1035 = vsub.f32 %v427, %v979
        %v1036 = vsub.f32 %v429, %v979
        %v1037 = vsub.f32 %v432, %v980
        %v1038 = vsub.f32 %v434, %v980
        %v1039 = vsub.f32 %v437, %v981
        %v1040 = vsub.f32 %v439, %v981
        %v1041 = vsub.f32 %v442, %v982
        %v1042 = vsub.f32 %v444, %v982
        %v1043 = vadd.f32 %v1031, 1e-05
        %v1044 = vadd.f32 %v1032, 1e-05
        %v1045 = vadd.f32 %v1033, 1e-05
        %v1046 = vadd.f32 %v1034, 1e-05
        %v1047 = vrsqrt.pop %v1043
        %v1048 = vmul.f32 %v1047, %v1043
        %v1049 = vmul.f32 %v1048, %v1047
        %v1050 = vmul.f32 0.5, %v1049
        %v1051 = vsub.f32 1.5, %v1050
        %v1052 = vmul.f32 %v1047, %v1051
        %vm1053 = vweird.f32 %v1043
        %vm1054 = vweird.f32 %v1047
        %vm1055 = vmor %vm1053, %vm1054
        %v1056 = vsel %vm1055, %v1047, %v1052
        %v1057 = vrsqrt.pop %v1044
        %v1058 = vmul.f32 %v1057, %v1044
        %v1059 = vmul.f32 %v1058, %v1057
        %v1060 = vmul.f32 0.5, %v1059
        %v1061 = vsub.f32 1.5, %v1060
        %v1062 = vmul.f32 %v1057, %v1061
        %vm1063 = vweird.f32 %v1044
        %vm1064 = vweird.f32 %v1057
        %vm1065 = vmor %vm1063, %vm1064
        %v1066 = vsel %vm1065, %v1057, %v1062
        %v1067 = vrsqrt.pop %v1045
        %v1068 = vmul.f32 %v1067, %v1045
        %v1069 = vmul.f32 %v1068, %v1067
        %v1070 = vmul.f32 0.5, %v1069
        %v1071 = vsub.f32 1.5, %v1070
        %v1072 = vmul.f32 %v1067, %v1071
        %vm1073 = vweird.f32 %v1045
        %vm1074 = vweird.f32 %v1067
        %vm1075 = vmor %vm1073, %vm1074
        %v1076 = vsel %vm1075, %v1067, %v1072
        %v1077 = vrsqrt.pop %v1046
        %v1078 = vmul.f32 %v1077, %v1046
        %v1079 = vmul.f32 %v1078, %v1077
        %v1080 = vmul.f32 0.5, %v1079
        %v1081 = vsub.f32 1.5, %v1080
        %v1082 = vmul.f32 %v1077, %v1081
        %vm1083 = vweird.f32 %v1046
        %vm1084 = vweird.f32 %v1077
        %vm1085 = vmor %vm1083, %vm1084
        %v1086 = vsel %vm1085, %v1077, %v1082
        %v1087 = vmul.f32 %v1035, %v1056
        %v1088 = vmul.f32 %v1036, %v1056
        %v1089 = vmul.f32 %v1037, %v1066
        %v1090 = vmul.f32 %v1038, %v1066
        %v1091 = vmul.f32 %v1039, %v1076
        %v1092 = vmul.f32 %v1040, %v1076
        %v1093 = vmul.f32 %v1041, %v1086
        %v1094 = vmul.f32 %v1042, %v1086
        %v1095 = vadd.f32 %v943, %v1087
        %v1096 = vadd.f32 %v944, %v1088
        %v1097 = vadd.f32 %v945, %v1089
        %v1098 = vadd.f32 %v946, %v1090
        %v1099 = vadd.f32 %v947, %v1091
        %v1100 = vadd.f32 %v948, %v1092
        %v1101 = vadd.f32 %v949, %v1093
        %v1102 = vadd.f32 %v950, %v1094
        %v1103 = vmax.f32 %v1095, 0.0
        %v1104 = vmax.f32 %v1096, 0.0
        %v1105 = vmax.f32 %v1097, 0.0
        %v1106 = vmax.f32 %v1098, 0.0
        %v1107 = vmax.f32 %v1099, 0.0
        %v1108 = vmax.f32 %v1100, 0.0
        %v1109 = vmax.f32 %v1101, 0.0
        %v1110 = vmax.f32 %v1102, 0.0
        %1111 = vst [vmem:[%s294] sm:$0xff] %v1103
        %1112 = vst [vmem:[%s294 + $0x8] sm:$0xff] %v1104
        %1113 = vst [vmem:[%s294 + $0x10] sm:$0xff] %v1105
        %1114 = vst [vmem:[%s294 + $0x18] sm:$0xff] %v1106
        %1115 = vst [vmem:[%s294 + $0x20] sm:$0xff] %v1107
        %1116 = vst [vmem:[%s294 + $0x28] sm:$0xff] %v1108
        %1117 = vst [vmem:[%s294 + $0x30] sm:$0xff] %v1109
        %1118 = vst [vmem:[%s294 + $0x38] sm:$0xff] %v1110
        %s1119 = sand.u32 %s127, 1
        %s1120 = scalar_lea.sflag [#allocation4], %s1119
        %s1121 = sand.u32 %s127, 1
        %s1122 = smul.addr %s1121, 64
        %s1123 = scalar_lea.vmem [#allocation10], %s1122
        // Predicated region
        $region53: #{tpu_custom_call.1} parent=35 // pred_check
          %p1124 = pneg %p137
        $region54: #{tpu_custom_call.1} parent=35 // pred_check_branch
          %1126 = sbr.rel (%p1124) target = $region56
        $region55: #{tpu_custom_call.1} parent=35 // pred_region
          %s1127 = smul.u32 4, %s25
          %1129 = vsyncadd %s1120, 0
          %s1130 = smul.addr %s1127, 2
          %s1131 = smul.addr %s1130, 8
          %s1132 = scalar_lea.hbm %s4, %s1131
          %s1133 = sshll.u32 %s1123, 4
          %s1134 = int_to_ptr.vmem [resolvable:$true] %s1133
          %s1135 = sshll.u32 %s1132, 4
          %s1136 = int_to_ptr.hbm [resolvable:$true] %s1135
          %1141 = dma.vmem_to_hbm [thread:$0]  %s1134, 1024, %s1136, %s1120, 128, 128, 8
        $region56: #{tpu_custom_call.1} parent=35 // pred_fallthru
          _
      $region36: #{tpu_custom_call.1} parent=5 // pred_fallthru
        _
      %p1142 = scmp.le.s32.totalorder 2, %s20
      // Predicated region
      $region57: #{tpu_custom_call.1} parent=5 // pred_check
        %p1143 = pneg %p1142
      $region58: #{tpu_custom_call.1} parent=5 // pred_check_branch
        %1145 = sbr.rel (%p1143) target = $region60
      $region59: #{tpu_custom_call.1} parent=5 // pred_region
        %s1146 = ssub.s32 %s20, 2
        // Predicated region
        $region61: #{tpu_custom_call.1} parent=59 // pred_check
          %p1147 = pneg %p143
        $region62: #{tpu_custom_call.1} parent=59 // pred_check_branch
          %1149 = sbr.rel (%p1147) target = $region64
        $region63: #{tpu_custom_call.1} parent=59 // pred_region
          %s1150 = sand.u32 %s128, 1
          %s1151 = scalar_lea.sflag [#allocation4], %s1150
          %s1152 = sand.u32 %s128, 1
          %s1153 = smul.addr %s1152, 64
          %s1154 = scalar_lea.vmem [#allocation10], %s1153
          %1156 = dma.done %s1151, 1024
        $region64: #{tpu_custom_call.1} parent=59 // pred_fallthru
          _
      $region60: #{tpu_custom_call.1} parent=5 // pred_fallthru
        _
    $region6: #{tpu_custom_call.1} parent=1 // loop_footer
      %s24 = sadd.s32 1, %s20
    $region7: #{tpu_custom_call.1} parent=1 // loop_footer_branch
      %19 = sbr.rel target = $region3
    $region8: #{tpu_custom_call.1} parent=1 // loop_exit
      _
    %1157 = vsyncpa [#allocation3], 1
    %s1158 = scalar_lea.sflag [#allocation3], 1
    %1159 = vsyncpa %s1158, 1
    %1160 = vsyncpa [#allocation6], 1
    %s1161 = scalar_lea.sflag [#allocation6], 1
    %1162 = vsyncpa %s1161, 1
    %1163 = vsyncpa [#allocation9], 1
    %1164 = vsyncpa [#allocation4], 1
    %s1165 = scalar_lea.sflag [#allocation4], 1
    %1166 = vsyncpa %s1165, 1

</llo_original>
